<compile_context>
chip_gen: v6e
topology: v6e:2x2x1
jax: 0.10.0
libtpu: 0.0.40
codegen_flags: <defaults>
</compile_context>

<pallas_src>
import math

import jax
import jax.numpy as jnp
from jax.experimental import pallas as pl
from jax.experimental.pallas import tpu as pltpu


def _round_up(x, m):
    return ((x + m - 1) // m) * m


# ----------------------------------------------------------------------------
# GELU (erf formulation, matching the torch.erf-based gelu in the reference).
# erf via Abramowitz & Stegun 7.1.26 polynomial; the 1/(1+p*|z|) term uses the
# EUP approximate reciprocal (error ~2^-12, far below the bf16 rounding of the
# hidden activation that follows).
# ----------------------------------------------------------------------------
def _gelu_erf(x):
    inv_sqrt2 = 0.7071067811865476
    z = x * inv_sqrt2
    az = jnp.abs(z)
    t = pl.reciprocal(1.0 + 0.3275911 * az, approx=True)
    poly = ((((1.061405429 * t - 1.453152027) * t + 1.421413741) * t
             - 0.284496736) * t + 0.254829592) * t
    erf_abs = 1.0 - poly * jnp.exp(-az * az)
    erf_z = jnp.where(z >= 0, erf_abs, -erf_abs)
    return 0.5 * x * (1.0 + erf_z)


# ----------------------------------------------------------------------------
# Kernel A: resident weights (single reduction step, no accumulator scratch).
#   out_tile = gelu(x_tile @ W1 + b1) @ W2 + b2
# ----------------------------------------------------------------------------
def _ffn_kernel_resident(x_ref, w1_ref, b1_ref, w2_ref, b2_ref, o_ref):
    x = x_ref[...].astype(w1_ref.dtype)                       # bf16 for the MXU
    h = jnp.dot(x, w1_ref[...], preferred_element_type=jnp.float32)
    h = _gelu_erf(h + b1_ref[...])                            # f32 VPU/EUP math
    # TODO(synk): training-mode dropout would be applied to `h` here.
    acc = jnp.dot(h.astype(w2_ref.dtype), w2_ref[...],
                  preferred_element_type=jnp.float32)
    o_ref[...] = (acc + b2_ref[...]).astype(o_ref.dtype)


# ----------------------------------------------------------------------------
# Kernel B: tiled d_ff reduction with f32 VMEM accumulator (weights too big to
# keep fully resident).
# ----------------------------------------------------------------------------
def _ffn_kernel_tiled(x_ref, w1_ref, b1_ref, w2_ref, b2_ref, o_ref, acc_ref):
    j = pl.program_id(1)                                      # d_ff tile index

    @pl.when(j == 0)
    def _():
        acc_ref[...] = jnp.zeros_like(acc_ref)

    x = x_ref[...].astype(w1_ref.dtype)
    h = jnp.dot(x, w1_ref[...], preferred_element_type=jnp.float32)
    h = _gelu_erf(h + b1_ref[...])
    # TODO(synk): training-mode dropout would be applied to `h` here.
    acc_ref[...] += jnp.dot(h.astype(w2_ref.dtype), w2_ref[...],
                            preferred_element_type=jnp.float32)

    @pl.when(j == pl.num_programs(1) - 1)
    def _():
        o_ref[...] = (acc_ref[...] + b2_ref[...]).astype(o_ref.dtype)


# ----------------------------------------------------------------------------
# VMEM sizing helpers
# ----------------------------------------------------------------------------
def _vmem_cap_bytes():
    try:
        return int(pltpu.get_tpu_info().vmem_capacity_bytes)
    except Exception:
        return 64 * 1024 * 1024          # v7x-safe fallback


def _vmem_tile_bytes(tm, tff, d_pad, x_bytes, w_bytes, o_bytes, multi_step):
    b = 2 * tm * d_pad * x_bytes                       # x tiles (double-buffered)
    b += 2 * d_pad * tff * w_bytes                     # W1 tile
    b += 2 * tff * d_pad * w_bytes                     # W2 tile
    b += 2 * 8 * tff * 4 + 2 * 8 * d_pad * 4           # biases (f32, sublane-padded)
    b += 2 * tm * d_pad * o_bytes                      # out tiles
    if multi_step:
        b += tm * d_pad * 4                            # f32 accumulator scratch
    return b


# ----------------------------------------------------------------------------
# Fused FFN wrapper.
#   x2d:   (N, d_model) original dtype
#   w1_t:  (D_pad, Dff_pad) compute dtype (pre-transposed + zero-padded)
#   b1_2d: (1, Dff_pad) f32
#   w2_t:  (Dff_pad, D_pad) compute dtype
#   b2_2d: (1, D_pad) f32
# ----------------------------------------------------------------------------
def ffn(x2d, w1_t, b1_2d, w2_t, b2_2d, *, d_model, out_dtype=None,
        tm_target=512, tff_max=None):
    N, D = x2d.shape
    D_pad, Dff_pad = w1_t.shape
    assert w2_t.shape == (Dff_pad, D_pad)
    assert D == d_model
    out_dtype = out_dtype or x2d.dtype

    row_align = 16                                      # bf16 sublane packing
    tm = min(tm_target, _round_up(N, row_align))
    # Prefer >= 2 row tiles so the "parallel" axis can feed both v7x TensorCores.
    if N > row_align and _round_up(N, tm) // tm < 2:
        tm = max(row_align, _round_up(-(-N // 2), row_align))

    vmem_cap = _vmem_cap_bytes()
    tile_budget = int(0.60 * vmem_cap)
    vmem_limit = int(0.85 * vmem_cap)

    x_bytes = jnp.dtype(x2d.dtype).itemsize
    w_bytes = jnp.dtype(w1_t.dtype).itemsize
    o_bytes = jnp.dtype(out_dtype).itemsize

    tff_cands = [t for t in range(Dff_pad, 127, -128) if Dff_pad % t == 0]
    if tff_max is not None:
        tff_cands = [t for t in tff_cands if t <= tff_max] or [128]

    tff = None
    while True:
        for cand in tff_cands:
            if _vmem_tile_bytes(tm, cand, D_pad, x_bytes, w_bytes, o_bytes,
                                cand != Dff_pad) <= tile_budget:
                tff = cand
                break
        if tff is not None or tm <= row_align:
            break
        tm = max(row_align, _round_up(tm // 2, row_align))
    if tff is None:
        tff = tff_cands[-1]

    N_pad = _round_up(N, tm)
    x = x2d
    if N_pad != N or D_pad != D:
        x = jnp.pad(x, ((0, N_pad - N), (0, D_pad - D)))

    m_tiles = N_pad // tm
    ff_tiles = Dff_pad // tff
    out_shape = jax.ShapeDtypeStruct((N_pad, D_pad), out_dtype)

    if ff_tiles == 1:
        # Resident weights: constant W1/W2 index maps -> fetched once per call.
        out = pl.pallas_call(
            _ffn_kernel_resident,
            out_shape=out_shape,
            grid_spec=pltpu.PrefetchScalarGridSpec(
                num_scalar_prefetch=0,
                grid=(m_tiles,),
                in_specs=[
                    pl.BlockSpec((tm, D_pad), lambda i: (i, 0)),       # x
                    pl.BlockSpec((D_pad, Dff_pad), lambda i: (0, 0)),  # W1 (resident)
                    pl.BlockSpec((1, Dff_pad), lambda i: (0, 0)),      # b1
                    pl.BlockSpec((Dff_pad, D_pad), lambda i: (0, 0)),  # W2 (resident)
                    pl.BlockSpec((1, D_pad), lambda i: (0, 0)),        # b2
                ],
                out_specs=pl.BlockSpec((tm, D_pad), lambda i: (i, 0)),
            ),
            compiler_params=pltpu.CompilerParams(
                dimension_semantics=("parallel",),
                vmem_limit_bytes=vmem_limit,
            ),
        )(x, w1_t, b1_2d, w2_t, b2_2d)
    else:
        out = pl.pallas_call(
            _ffn_kernel_tiled,
            out_shape=out_shape,
            grid_spec=pltpu.PrefetchScalarGridSpec(
                num_scalar_prefetch=0,
                grid=(m_tiles, ff_tiles),
                in_specs=[
                    pl.BlockSpec((tm, D_pad), lambda i, j: (i, 0)),    # x row tile
                    pl.BlockSpec((D_pad, tff), lambda i, j: (0, j)),   # W1 col tile
                    pl.BlockSpec((1, tff), lambda i, j: (0, j)),       # b1 tile
                    pl.BlockSpec((tff, D_pad), lambda i, j: (j, 0)),   # W2 row tile
                    pl.BlockSpec((1, D_pad), lambda i, j: (0, 0)),     # b2
                ],
                out_specs=pl.BlockSpec((tm, D_pad), lambda i, j: (i, 0)),
                scratch_shapes=[pltpu.VMEM((tm, D_pad), jnp.float32)],
            ),
            compiler_params=pltpu.CompilerParams(
                dimension_semantics=("parallel", "arbitrary"),
                vmem_limit_bytes=vmem_limit,
            ),
        )(x, w1_t, b1_2d, w2_t, b2_2d)

    if N_pad != N or D_pad != d_model:
        out = out[:N, :d_model]
    return out


# ----------------------------------------------------------------------------
# Module wrapper (PyTorch nn.Linear parameter layout + init)
# ----------------------------------------------------------------------------
class PositionwiseFeedForwardPallas:
    def __init__(self, d_model, d_ff, key, dropout=0.1,
                 compute_dtype=jnp.bfloat16):
        self.d_model, self.d_ff = d_model, d_ff
        self.compute_dtype = compute_dtype
        k1, k2, k3, k4 = jax.random.split(key, 4)
        bw1 = 1.0 / math.sqrt(d_model)
        bw2 = 1.0 / math.sqrt(d_ff)
        # PyTorch layout: weight (out, in), bias (out,)  -- kept in f32 as master.
        self.W1 = jax.random.uniform(k1, (d_ff, d_model), minval=-bw1, maxval=bw1,
                                     dtype=jnp.float32)
        self.b1 = jax.random.uniform(k2, (d_ff,), minval=-bw1, maxval=bw1,
                                     dtype=jnp.float32)
        self.W2 = jax.random.uniform(k3, (d_model, d_ff), minval=-bw2, maxval=bw2,
                                     dtype=jnp.float32)
        self.b2 = jax.random.uniform(k4, (d_model,), minval=-bw2, maxval=bw2,
                                     dtype=jnp.float32)

        # One-time: transpose to MXU-friendly (in, out), zero-pad to multiples of
        # 128, cast weights to the compute dtype (bf16). Biases stay f32.
        D_pad = _round_up(d_model, 128)
        Dff_pad = _round_up(d_ff, 128)
        self.W1_t = jnp.pad(self.W1.T, ((0, D_pad - d_model), (0, Dff_pad - d_ff))
                            ).astype(compute_dtype)                  # (D_pad, Dff_pad)
        self.W2_t = jnp.pad(self.W2.T, ((0, Dff_pad - d_ff), (0, D_pad - d_model))
                            ).astype(compute_dtype)                  # (Dff_pad, D_pad)
        self.b1_p = jnp.pad(self.b1, (0, Dff_pad - d_ff)).reshape(1, Dff_pad)
        self.b2_p = jnp.pad(self.b2, (0, D_pad - d_model)).reshape(1, D_pad)

    def __call__(self, x, *, tff_max=None):
        # x: (B, L, d_model). Dropout = identity (inference).
        B, L, D = x.shape
        y = ffn(x.reshape(B * L, D), self.W1_t, self.b1_p, self.W2_t, self.b2_p,
                d_model=self.d_model, out_dtype=x.dtype, tff_max=tff_max)
        return y.reshape(B, L, D)


# ----------------------------------------------------------------------------
# Pure-JAX reference with matching mixed-precision numerics (bf16 operands,
# f32 accumulate, exact erf GELU) for verification.
# ----------------------------------------------------------------------------
def reference_forward(mod, x):
    f32 = jnp.float32
    cd = mod.compute_dtype
    xb = x.astype(cd).astype(f32)
    W1 = mod.W1.astype(cd).astype(f32)
    W2 = mod.W2.astype(cd).astype(f32)
    h = xb @ W1.T + mod.b1
    g = h * 0.5 * (1.0 + jax.lax.erf(h / math.sqrt(2.0)))
    g = g.astype(cd).astype(f32)
    return g @ W2.T + mod.b2


if __name__ == "__main__":
    key0 = jax.random.PRNGKey(0)
    k_mod, k_mod2, k_x = jax.random.split(key0, 3)

    # Small test: resident-weights (single reduction step) path.
    B, L, d_model, d_ff = 2, 8, 32, 128
    ff_mod = PositionwiseFeedForwardPallas(d_model, d_ff, k_mod)
    x = jax.random.normal(k_x, (B, L, d_model), dtype=jnp.float32)

    out = jax.block_until_ready(ff_mod(x))
    ref = reference_forward(ff_mod, x)
    assert out.shape == (B, L, d_model)
    err = float(jnp.max(jnp.abs(out - ref)))
    assert jnp.allclose(out, ref, atol=1e-2, rtol=1e-2), f"max abs err {err}"

    # Second test: force the tiled-reduction (accumulator) path.
    ff_mod2 = PositionwiseFeedForwardPallas(d_model, 256, k_mod2)
    out2 = jax.block_until_ready(ff_mod2(x, tff_max=128))
    ref2 = reference_forward(ff_mod2, x)
    err2 = float(jnp.max(jnp.abs(out2 - ref2)))
    assert jnp.allclose(out2, ref2, atol=1e-2, rtol=1e-2), f"max abs err {err2}"

    print("KERNEL_OK")
</pallas_src>

<mosaic_0001>
module attributes {stable_mosaic.version = 11 : i64} {
  func.func @_ffn_kernel_resident(%arg0: i32, %arg1: memref<16x128xf32, #tpu.memory_space<vmem>>, %arg2: memref<128x128xbf16, #tpu.memory_space<vmem>>, %arg3: memref<1x128xf32, #tpu.memory_space<vmem>>, %arg4: memref<128x128xbf16, #tpu.memory_space<vmem>>, %arg5: memref<1x128xf32, #tpu.memory_space<vmem>>, %arg6: memref<16x128xf32, #tpu.memory_space<vmem>>) attributes {dimension_semantics = [#tpu.dimension_semantics<parallel>], iteration_bounds = array<i64: 1>, scalar_prefetch = 0 : i64, scratch_operands = 0 : i64, tpu.core_type = #tpu.core_type<tc>, window_params = [{transform_indices = @transform_0, window_bounds = array<i64: 16, 128>}, {pipeline_mode = #tpu.pipeline_mode<synchronous>, transform_indices = @transform_1, window_bounds = array<i64: 128, 128>}, {pipeline_mode = #tpu.pipeline_mode<synchronous>, transform_indices = @transform_2, window_bounds = array<i64: 1, 128>}, {pipeline_mode = #tpu.pipeline_mode<synchronous>, transform_indices = @transform_3, window_bounds = array<i64: 128, 128>}, {pipeline_mode = #tpu.pipeline_mode<synchronous>, transform_indices = @transform_4, window_bounds = array<i64: 1, 128>}, {transform_indices = @transform_5, window_bounds = array<i64: 16, 128>}]} {
    %c0 = arith.constant 0 : index
    %c0_0 = arith.constant 0 : index
    %0 = vector.load %arg1[%c0, %c0_0] : memref<16x128xf32, #tpu.memory_space<vmem>>, vector<16x128xf32>
    %1 = arith.truncf %0 : vector<16x128xf32> to vector<16x128xbf16>
    %c0_1 = arith.constant 0 : index
    %c0_2 = arith.constant 0 : index
    %2 = vector.load %arg2[%c0_1, %c0_2] : memref<128x128xbf16, #tpu.memory_space<vmem>>, vector<128x128xbf16>
    %cst = arith.constant dense<0.000000e+00> : vector<16x128xf32>
    %3 = tpu.matmul %1, %2, %cst {dimension_numbers = #tpu.dot_dimension_numbers<[1], [0], [0], [1], [0, 0, 1, 1], [], []>} : vector<16x128xbf16>, vector<128x128xbf16>, vector<16x128xf32> -> vector<16x128xf32>
    %c0_3 = arith.constant 0 : index
    %c0_4 = arith.constant 0 : index
    %4 = vector.load %arg3[%c0_3, %c0_4] : memref<1x128xf32, #tpu.memory_space<vmem>>, vector<1x128xf32>
    %5 = vector.broadcast %4 : vector<1x128xf32> to vector<16x128xf32>
    %6 = arith.addf %3, %5 : vector<16x128xf32>
    %cst_5 = arith.constant 0.707106769 : f32
    %7 = vector.broadcast %cst_5 : f32 to vector<16x128xf32>
    %8 = arith.mulf %6, %7 : vector<16x128xf32>
    %9 = math.absf %8 : vector<16x128xf32>
    %cst_6 = arith.constant 0.327591091 : f32
    %10 = vector.broadcast %cst_6 : f32 to vector<16x128xf32>
    %11 = arith.mulf %10, %9 : vector<16x128xf32>
    %cst_7 = arith.constant 1.000000e+00 : f32
    %12 = vector.broadcast %cst_7 : f32 to vector<16x128xf32>
    %13 = arith.addf %12, %11 : vector<16x128xf32>
    %14 = tpu.reciprocal %13 {approx = true} : vector<16x128xf32> -> vector<16x128xf32>
    %cst_8 = arith.constant 1.06140542 : f32
    %15 = vector.broadcast %cst_8 : f32 to vector<16x128xf32>
    %16 = arith.mulf %15, %14 : vector<16x128xf32>
    %cst_9 = arith.constant 1.45315206 : f32
    %17 = vector.broadcast %cst_9 : f32 to vector<16x128xf32>
    %18 = arith.subf %16, %17 : vector<16x128xf32>
    %19 = arith.mulf %18, %14 : vector<16x128xf32>
    %cst_10 = arith.constant 1.42141378 : f32
    %20 = vector.broadcast %cst_10 : f32 to vector<16x128xf32>
    %21 = arith.addf %19, %20 : vector<16x128xf32>
    %22 = arith.mulf %21, %14 : vector<16x128xf32>
    %cst_11 = arith.constant 0.284496725 : f32
    %23 = vector.broadcast %cst_11 : f32 to vector<16x128xf32>
    %24 = arith.subf %22, %23 : vector<16x128xf32>
    %25 = arith.mulf %24, %14 : vector<16x128xf32>
    %cst_12 = arith.constant 0.254829586 : f32
    %26 = vector.broadcast %cst_12 : f32 to vector<16x128xf32>
    %27 = arith.addf %25, %26 : vector<16x128xf32>
    %28 = arith.mulf %27, %14 : vector<16x128xf32>
    %cst_13 = arith.constant 0.000000e+00 : f32
    %29 = vector.broadcast %cst_13 : f32 to vector<16x128xf32>
    %30 = arith.subf %29, %9 : vector<16x128xf32>
    %31 = arith.mulf %30, %9 : vector<16x128xf32>
    %32 = math.exp %31 : vector<16x128xf32>
    %33 = arith.mulf %28, %32 : vector<16x128xf32>
    %cst_14 = arith.constant 1.000000e+00 : f32
    %34 = vector.broadcast %cst_14 : f32 to vector<16x128xf32>
    %35 = arith.subf %34, %33 : vector<16x128xf32>
    %cst_15 = arith.constant 0.000000e+00 : f32
    %36 = vector.broadcast %cst_15 : f32 to vector<16x128xf32>
    %37 = arith.cmpf oge, %8, %36 : vector<16x128xf32>
    %cst_16 = arith.constant 0.000000e+00 : f32
    %38 = vector.broadcast %cst_16 : f32 to vector<16x128xf32>
    %39 = arith.subf %38, %35 : vector<16x128xf32>
    %40 = arith.select %37, %35, %39 : vector<16x128xi1>, vector<16x128xf32>
    %cst_17 = arith.constant 5.000000e-01 : f32
    %41 = vector.broadcast %cst_17 : f32 to vector<16x128xf32>
    %42 = arith.mulf %41, %6 : vector<16x128xf32>
    %cst_18 = arith.constant 1.000000e+00 : f32
    %43 = vector.broadcast %cst_18 : f32 to vector<16x128xf32>
    %44 = arith.addf %43, %40 : vector<16x128xf32>
    %45 = arith.mulf %42, %44 : vector<16x128xf32>
    %46 = arith.truncf %45 : vector<16x128xf32> to vector<16x128xbf16>
    %c0_19 = arith.constant 0 : index
    %c0_20 = arith.constant 0 : index
    %47 = vector.load %arg4[%c0_19, %c0_20] : memref<128x128xbf16, #tpu.memory_space<vmem>>, vector<128x128xbf16>
    %cst_21 = arith.constant dense<0.000000e+00> : vector<16x128xf32>
    %48 = tpu.matmul %46, %47, %cst_21 {dimension_numbers = #tpu.dot_dimension_numbers<[1], [0], [0], [1], [0, 0, 1, 1], [], []>} : vector<16x128xbf16>, vector<128x128xbf16>, vector<16x128xf32> -> vector<16x128xf32>
    %c0_22 = arith.constant 0 : index
    %c0_23 = arith.constant 0 : index
    %49 = vector.load %arg5[%c0_22, %c0_23] : memref<1x128xf32, #tpu.memory_space<vmem>>, vector<1x128xf32>
    %50 = vector.broadcast %49 : vector<1x128xf32> to vector<16x128xf32>
    %51 = arith.addf %48, %50 : vector<16x128xf32>
    %c0_24 = arith.constant 0 : index
    %c0_25 = arith.constant 0 : index
    %52 = vector.load %arg6[%c0_24, %c0_25] : memref<16x128xf32, #tpu.memory_space<vmem>>, vector<16x128xf32>
    tpu.vector_store %arg6[%c0_24, %c0_25], %51 {strides = array<i32>} : memref<16x128xf32, #tpu.memory_space<vmem>>, vector<16x128xf32>,
    return
  }
  func.func @transform_0(%arg0: i32) -> (i32, i32) {
    %c0_i32 = arith.constant 0 : i32
    %c0_i32_0 = arith.constant 0 : i32
    return %arg0, %c0_i32 : i32, i32
  }
  func.func @transform_1(%arg0: i32) -> (i32, i32) {
    %c0_i32 = arith.constant 0 : i32
    %c0_i32_0 = arith.constant 0 : i32
    %c0_i32_1 = arith.constant 0 : i32
    return %c0_i32, %c0_i32_0 : i32, i32
  }
  func.func @transform_2(%arg0: i32) -> (i32, i32) {
    %c0_i32 = arith.constant 0 : i32
    %c0_i32_0 = arith.constant 0 : i32
    %c0_i32_1 = arith.constant 0 : i32
    return %c0_i32, %c0_i32_0 : i32, i32
  }
  func.func @transform_3(%arg0: i32) -> (i32, i32) {
    %c0_i32 = arith.constant 0 : i32
    %c0_i32_0 = arith.constant 0 : i32
    %c0_i32_1 = arith.constant 0 : i32
    return %c0_i32, %c0_i32_0 : i32, i32
  }
  func.func @transform_4(%arg0: i32) -> (i32, i32) {
    %c0_i32 = arith.constant 0 : i32
    %c0_i32_0 = arith.constant 0 : i32
    %c0_i32_1 = arith.constant 0 : i32
    return %c0_i32, %c0_i32_0 : i32, i32
  }
  func.func @transform_5(%arg0: i32) -> (i32, i32) {
    %c0_i32 = arith.constant 0 : i32
    %c0_i32_0 = arith.constant 0 : i32
    return %arg0, %c0_i32 : i32, i32
  }
}

</mosaic_0001>

<llo_original>
// kernel: tpu_custom_call.1
$region0: #{tpu_custom_call.1}
  #allocation0 [shape = 'u32[]', space=smem, size = 0x4, offset = 0x4, fixed_abs, tag = 'smem constant byte address 0x4 - core index']
  #allocation1 [shape = 'u32[144,128]{1,0:T(1,128)}', space=vmem, size = 0x12000, scoped, tag = 'internal scratch']
  %s0 = inlined_call_operand.hbm [shape: f32[16,128], index: 0, kind: input, shape index: {}]
  %s1 = inlined_call_operand.hbm [shape: bf16[128,128], index: 1, kind: input, shape index: {}]
  %s2 = inlined_call_operand.vmem [shape: f32[1,128], index: 2, kind: input, shape index: {}]
  %s3 = inlined_call_operand.hbm [shape: bf16[128,128], index: 3, kind: input, shape index: {}]
  %s4 = inlined_call_operand.vmem [shape: f32[1,128], index: 4, kind: input, shape index: {}]
  %s5 = inlined_call_operand.hbm [shape: f32[16,128], index: 5, kind: output, shape index: {}]
  %s6 = sld [smem:[#allocation0]]
  $region42: #{tpu_custom_call.1} parent=0
    _
  %s8 = ssub.s32 1, %s6
  %s9 = scalar_select 0, %s8, %s6
  $region1: #{tpu_custom_call.1} parent=0
    #allocation2 [shape = 'u8[8192]{0}', space=vmem, size = 0x2000, scoped, tag = 'input window, operand 0, single buffered']
    #allocation3 [shape = 's32[1]{0}', space=sflag, size = 0x4, scoped, tag = 'scoped memory for tpu_custom_call.1']
    #allocation4 [shape = 's32[1]{0}', space=sflag, size = 0x4, scoped, tag = 'scoped memory for tpu_custom_call.1']
    #allocation5 [shape = 'u8[32768]{0}', space=vmem, size = 0x8000, scoped, tag = 'input window, operand 1, single buffered']
    #allocation6 [shape = 's32[1]{0}', space=sflag, size = 0x4, scoped, tag = 'scoped memory for tpu_custom_call.1']
    #allocation7 [shape = 'u8[32768]{0}', space=vmem, size = 0x8000, scoped, tag = 'input window, operand 3, single buffered']
    #allocation8 [shape = 'u8[8192]{0}', space=vmem, size = 0x2000, scoped, tag = 'output window, operand 0, single buffered']
    %10 = vsyncpa [#allocation3], 0
    %11 = vsyncpa [#allocation6], 0
    %12 = vsyncpa [#allocation4], 0
    // Predicated region
    $region2: #{tpu_custom_call.1} parent=1 // pred_check
      _
    $region3: #{tpu_custom_call.1} parent=1 // pred_check_branch
      %14 = sbr.rel (0) target = $region5
    $region4: #{tpu_custom_call.1} parent=1 // pred_region
      %s16 = ssub.s32 256, 256
      %17 = vsyncadd [#allocation3], %s16
      %s18 = sshll.u32 [#allocation2], 4
      %s19 = int_to_ptr.vmem [resolvable:$true] %s18
      %24 = dma.hbm_to_vmem [thread:$0]  %s0, 256, %s19, [#allocation3], 128, 128, 8
    $region5: #{tpu_custom_call.1} parent=1 // pred_fallthru
      _
    // Predicated region
    $region6: #{tpu_custom_call.1} parent=1 // pred_check
      _
    $region7: #{tpu_custom_call.1} parent=1 // pred_check_branch
      %26 = sbr.rel (0) target = $region9
    $region8: #{tpu_custom_call.1} parent=1 // pred_region
      %s28 = ssub.s32 1024, 1024
      %29 = vsyncadd [#allocation6], %s28
      %s30 = sshll.u32 [#allocation5], 4
      %s31 = int_to_ptr.vmem [resolvable:$true] %s30
      %36 = dma.hbm_to_vmem [thread:$0]  %s1, 1024, %s31, [#allocation6], 64, 64, 4
    $region9: #{tpu_custom_call.1} parent=1 // pred_fallthru
      _
    // Predicated region
    $region10: #{tpu_custom_call.1} parent=1 // pred_check
      _
    $region11: #{tpu_custom_call.1} parent=1 // pred_check_branch
      %38 = sbr.rel (0) target = $region13
    $region12: #{tpu_custom_call.1} parent=1 // pred_region
      _
    $region13: #{tpu_custom_call.1} parent=1 // pred_fallthru
      _
    // Predicated region
    $region14: #{tpu_custom_call.1} parent=1 // pred_check
      _
    $region15: #{tpu_custom_call.1} parent=1 // pred_check_branch
      %40 = sbr.rel (0) target = $region17
    $region16: #{tpu_custom_call.1} parent=1 // pred_region
      %s42 = ssub.s32 1024, 1024
      %43 = vsyncadd [#allocation6], %s42
      %s44 = sshll.u32 [#allocation7], 4
      %s45 = int_to_ptr.vmem [resolvable:$true] %s44
      %50 = dma.hbm_to_vmem [thread:$0]  %s3, 1024, %s45, [#allocation6], 64, 64, 4
    $region17: #{tpu_custom_call.1} parent=1 // pred_fallthru
      _
    // Predicated region
    $region18: #{tpu_custom_call.1} parent=1 // pred_check
      _
    $region19: #{tpu_custom_call.1} parent=1 // pred_check_branch
      %52 = sbr.rel (0) target = $region21
    $region20: #{tpu_custom_call.1} parent=1 // pred_region
      _
    $region21: #{tpu_custom_call.1} parent=1 // pred_fallthru
      _
    // Predicated region
    $region22: #{tpu_custom_call.1} parent=1 // pred_check
      _
    $region23: #{tpu_custom_call.1} parent=1 // pred_check_branch
      %54 = sbr.rel (0) target = $region25
    $region24: #{tpu_custom_call.1} parent=1 // pred_region
      %55 = dma.done [#allocation3], 256
    $region25: #{tpu_custom_call.1} parent=1 // pred_fallthru
      _
    // Predicated region
    $region26: #{tpu_custom_call.1} parent=1 // pred_check
      _
    $region27: #{tpu_custom_call.1} parent=1 // pred_check_branch
      %57 = sbr.rel (0) target = $region29
    $region28: #{tpu_custom_call.1} parent=1 // pred_region
      %58 = dma.done [#allocation6], 1024
    $region29: #{tpu_custom_call.1} parent=1 // pred_fallthru
      _
    // Predicated region
    $region30: #{tpu_custom_call.1} parent=1 // pred_check
      _
    $region31: #{tpu_custom_call.1} parent=1 // pred_check_branch
      %60 = sbr.rel (0) target = $region33
    $region32: #{tpu_custom_call.1} parent=1 // pred_region
      %61 = dma.done [#allocation6], 1024
    $region33: #{tpu_custom_call.1} parent=1 // pred_fallthru
      _
    %v63 = vld [vmem:[#allocation2] sm:$0xff]
    %v64 = vld [vmem:[#allocation2 + $0x8] sm:$0xff]
    %v65 = vpack.c.bf16 %v64, %v63
    %v66 = vld [vmem:[#allocation5] sm:$0xf]
    %v67 = vld [vmem:[#allocation5 + $0x4] sm:$0xf]
    %v68 = vld [vmem:[#allocation5 + $0x8] sm:$0xf]
    %v69 = vld [vmem:[#allocation5 + $0xc] sm:$0xf]
    %v70 = vld [vmem:[#allocation5 + $0x10] sm:$0xf]
    %v71 = vld [vmem:[#allocation5 + $0x14] sm:$0xf]
    %v72 = vld [vmem:[#allocation5 + $0x18] sm:$0xf]
    %v73 = vld [vmem:[#allocation5 + $0x1c] sm:$0xf]
    %v74 = vld [vmem:[#allocation5 + $0x20] sm:$0xf]
    %v75 = vld [vmem:[#allocation5 + $0x24] sm:$0xf]
    %v76 = vld [vmem:[#allocation5 + $0x28] sm:$0xf]
    %v77 = vld [vmem:[#allocation5 + $0x2c] sm:$0xf]
    %v78 = vld [vmem:[#allocation5 + $0x30] sm:$0xf]
    %v79 = vld [vmem:[#allocation5 + $0x34] sm:$0xf]
    %v80 = vld [vmem:[#allocation5 + $0x38] sm:$0xf]
    %v81 = vld [vmem:[#allocation5 + $0x3c] sm:$0xf]
    %v82 = vld [vmem:[%s2] sm:$0x1]
    %v84 = vlaneseq
    %v85 = vshrl.u32 %v84, 7
    %v86 = vsub.s32 0, %v85
    %v87 = vrot.slane %v82, %v86
    %v105 = vunpack.c.l.b16 %v66
    %v106 = vunpack.c.l.b16 %v67
    %v107 = vunpack.c.l.b16 %v68
    %v108 = vunpack.c.l.b16 %v69
    %v109 = vunpack.c.l.b16 %v70
    %v110 = vunpack.c.l.b16 %v71
    %v111 = vunpack.c.l.b16 %v72
    %v112 = vunpack.c.l.b16 %v73
    %v113 = vunpack.c.l.b16 %v74
    %v114 = vunpack.c.l.b16 %v75
    %v115 = vunpack.c.l.b16 %v76
    %v116 = vunpack.c.l.b16 %v77
    %v117 = vunpack.c.l.b16 %v78
    %v118 = vunpack.c.l.b16 %v79
    %v119 = vunpack.c.l.b16 %v80
    %v120 = vunpack.c.l.b16 %v81
    %v121 = vpack.c.b16 %v106, %v105
    %v122 = vpack.c.b16 %v108, %v107
    %v123 = vpack.c.b16 %v110, %v109
    %v124 = vpack.c.b16 %v112, %v111
    %v125 = vpack.c.b16 %v114, %v113
    %v126 = vpack.c.b16 %v116, %v115
    %v127 = vpack.c.b16 %v118, %v117
    %v128 = vpack.c.b16 %v120, %v119
    %137 = vmatprep.subr.bf16.mxu0 0
    %138 = vmatpush1.bf16.msra.mxu0 %v128
    %139 = vmatprep.subr.bf16.mxu0 0
    %140 = vmatpush1.bf16.msra.mxu0 %v127
    %141 = vmatprep.subr.bf16.mxu0 0
    %142 = vmatpush1.bf16.msra.mxu0 %v126
    %143 = vmatprep.subr.bf16.mxu0 0
    %144 = vmatpush1.bf16.msra.mxu0 %v125
    %145 = vmatprep.subr.bf16.mxu0 0
    %146 = vmatpush1.bf16.msra.mxu0 %v124
    %147 = vmatprep.subr.bf16.mxu0 0
    %148 = vmatpush1.bf16.msra.mxu0 %v123
    %149 = vmatprep.subr.bf16.mxu0 0
    %150 = vmatpush1.bf16.msra.mxu0 %v122
    %151 = vmatprep.subr.bf16.mxu0 0
    %152 = vmatpush1.bf16.msra.mxu0 %v121
    %153 = vmatprep.subr.bf16.mxu0 0
    %154 = vmatpush2.bf16.msra.mxu0 0
    %155 = vmatprep.subr.bf16.mxu0 0
    %156 = vmatpush2.bf16.msra.mxu0 0
    %157 = vmatprep.subr.bf16.mxu0 0
    %158 = vmatpush2.bf16.msra.mxu0 0
    %159 = vmatprep.subr.bf16.mxu0 0
    %160 = vmatpush2.bf16.msra.mxu0 0
    %161 = vmatprep.subr.bf16.mxu0 0
    %162 = vmatpush2.bf16.msra.mxu0 0
    %163 = vmatprep.subr.bf16.mxu0 0
    %164 = vmatpush2.bf16.msra.mxu0 0
    %165 = vmatprep.subr.bf16.mxu0 0
    %166 = vmatpush2.bf16.msra.mxu0 0
    %167 = vmatprep.subr.bf16.mxu0 0
    %168 = vmatpush2.bf16.msra.mxu0 0
    %169 = vmatprep.mubr.bf16.mxu0 0
    %170 = vmatmul.mubr.bf16.gmra.mxu0 %v65
    %v171 = vpop.f32.mrf.mxu0
    %v172 = vadd.f32 %v87, %v171
    %v173 = vpop.f32.mrf.mxu0
    %v174 = vpop.f32.mrf.mxu0
    %v175 = vadd.f32 %v87, %v174
    %v176 = vpop.f32.mrf.mxu0
    %177 = vdwg.mxu0
    %v178 = vmul.f32 %v172, 0.70710677
    %v179 = vmul.f32 %v175, 0.70710677
    %v180 = vand.u32 2147483647, %v178
    %v181 = vand.u32 2147483647, %v179
    %v182 = vmul.f32 %v180, 0.3275911
    %v183 = vmul.f32 %v181, 0.3275911
    %v184 = vadd.f32 %v182, 1.0
    %v185 = vadd.f32 %v183, 1.0
    %v186 = vrcp.pop %v184
    %v187 = vrcp.pop %v185
    %v188 = vmul.f32 %v186, 1.0614054
    %v189 = vmul.f32 %v187, 1.0614054
    %v190 = vsub.f32 %v188, 1.4531521
    %v191 = vsub.f32 %v189, 1.4531521
    %v192 = vmul.f32 %v190, %v186
    %v193 = vmul.f32 %v191, %v187
    %v194 = vadd.f32 %v192, 1.4214138
    %v195 = vadd.f32 %v193, 1.4214138
    %v196 = vmul.f32 %v194, %v186
    %v197 = vmul.f32 %v195, %v187
    %v198 = vsub.f32 %v196, 0.28449672
    %v199 = vsub.f32 %v197, 0.28449672
    %v200 = vmul.f32 %v198, %v186
    %v201 = vmul.f32 %v199, %v187
    %v202 = vadd.f32 %v200, 0.2548296
    %v203 = vadd.f32 %v201, 0.2548296
    %v204 = vmul.f32 %v202, %v186
    %v205 = vmul.f32 %v203, %v187
    %v206 = vsub.f32 0.0, %v180
    %v207 = vsub.f32 0.0, %v181
    %v208 = vmul.f32 %v206, %v180
    %v209 = vmul.f32 %v207, %v181
    %v210 = vmul.f32 %v208, 1.442695
    %v211 = vpow.pop %v210
    %v212 = vmul.f32 %v209, 1.442695
    %v213 = vpow.pop %v212
    %v214 = vmul.f32 %v204, %v211
    %v215 = vmul.f32 %v205, %v213
    %v216 = vsub.f32 1.0, %v214
    %v217 = vsub.f32 1.0, %v215
    %vm218 = vcmp.ge.f32.partialorder %v178, 0.0
    %vm219 = vcmp.ge.f32.partialorder %v179, 0.0
    %v220 = vsub.f32 0.0, %v216
    %v221 = vsub.f32 0.0, %v217
    %v222 = vsel %vm218, %v216, %v220
    %v223 = vsel %vm219, %v217, %v221
    %v224 = vmul.f32 %v172, 0.5
    %v225 = vmul.f32 %v175, 0.5
    %v226 = vadd.f32 %v222, 1.0
    %v227 = vadd.f32 %v223, 1.0
    %v228 = vmul.f32 %v224, %v226
    %v229 = vmul.f32 %v225, %v227
    %v230 = vpack.c.bf16 %v229, %v228
    %v231 = vld [vmem:[#allocation7] sm:$0xf]
    %v232 = vld [vmem:[#allocation7 + $0x4] sm:$0xf]
    %v233 = vld [vmem:[#allocation7 + $0x8] sm:$0xf]
    %v234 = vld [vmem:[#allocation7 + $0xc] sm:$0xf]
    %v235 = vld [vmem:[#allocation7 + $0x10] sm:$0xf]
    %v236 = vld [vmem:[#allocation7 + $0x14] sm:$0xf]
    %v237 = vld [vmem:[#allocation7 + $0x18] sm:$0xf]
    %v238 = vld [vmem:[#allocation7 + $0x1c] sm:$0xf]
    %v239 = vld [vmem:[#allocation7 + $0x20] sm:$0xf]
    %v240 = vld [vmem:[#allocation7 + $0x24] sm:$0xf]
    %v241 = vld [vmem:[#allocation7 + $0x28] sm:$0xf]
    %v242 = vld [vmem:[#allocation7 + $0x2c] sm:$0xf]
    %v243 = vld [vmem:[#allocation7 + $0x30] sm:$0xf]
    %v244 = vld [vmem:[#allocation7 + $0x34] sm:$0xf]
    %v245 = vld [vmem:[#allocation7 + $0x38] sm:$0xf]
    %v246 = vld [vmem:[#allocation7 + $0x3c] sm:$0xf]
    %v247 = vld [vmem:[%s4] sm:$0x1]
    %v249 = vlaneseq
    %v250 = vshrl.u32 %v249, 7
    %v251 = vsub.s32 0, %v250
    %v252 = vrot.slane %v247, %v251
    %v270 = vunpack.c.l.b16 %v231
    %v271 = vunpack.c.l.b16 %v232
    %v272 = vunpack.c.l.b16 %v233
    %v273 = vunpack.c.l.b16 %v234
    %v274 = vunpack.c.l.b16 %v235
    %v275 = vunpack.c.l.b16 %v236
    %v276 = vunpack.c.l.b16 %v237
    %v277 = vunpack.c.l.b16 %v238
    %v278 = vunpack.c.l.b16 %v239
    %v279 = vunpack.c.l.b16 %v240
    %v280 = vunpack.c.l.b16 %v241
    %v281 = vunpack.c.l.b16 %v242
    %v282 = vunpack.c.l.b16 %v243
    %v283 = vunpack.c.l.b16 %v244
    %v284 = vunpack.c.l.b16 %v245
    %v285 = vunpack.c.l.b16 %v246
    %v286 = vpack.c.b16 %v271, %v270
    %v287 = vpack.c.b16 %v273, %v272
    %v288 = vpack.c.b16 %v275, %v274
    %v289 = vpack.c.b16 %v277, %v276
    %v290 = vpack.c.b16 %v279, %v278
    %v291 = vpack.c.b16 %v281, %v280
    %v292 = vpack.c.b16 %v283, %v282
    %v293 = vpack.c.b16 %v285, %v284
    %302 = vmatprep.subr.bf16.mxu0 0
    %303 = vmatpush1.bf16.msra.mxu0 %v293
    %304 = vmatprep.subr.bf16.mxu0 0
    %305 = vmatpush1.bf16.msra.mxu0 %v292
    %306 = vmatprep.subr.bf16.mxu0 0
    %307 = vmatpush1.bf16.msra.mxu0 %v291
    %308 = vmatprep.subr.bf16.mxu0 0
    %309 = vmatpush1.bf16.msra.mxu0 %v290
    %310 = vmatprep.subr.bf16.mxu0 0
    %311 = vmatpush1.bf16.msra.mxu0 %v289
    %312 = vmatprep.subr.bf16.mxu0 0
    %313 = vmatpush1.bf16.msra.mxu0 %v288
    %314 = vmatprep.subr.bf16.mxu0 0
    %315 = vmatpush1.bf16.msra.mxu0 %v287
    %316 = vmatprep.subr.bf16.mxu0 0
    %317 = vmatpush1.bf16.msra.mxu0 %v286
    %318 = vmatprep.subr.bf16.mxu0 0
    %319 = vmatpush2.bf16.msra.mxu0 0
    %320 = vmatprep.subr.bf16.mxu0 0
    %321 = vmatpush2.bf16.msra.mxu0 0
    %322 = vmatprep.subr.bf16.mxu0 0
    %323 = vmatpush2.bf16.msra.mxu0 0
    %324 = vmatprep.subr.bf16.mxu0 0
    %325 = vmatpush2.bf16.msra.mxu0 0
    %326 = vmatprep.subr.bf16.mxu0 0
    %327 = vmatpush2.bf16.msra.mxu0 0
    %328 = vmatprep.subr.bf16.mxu0 0
    %329 = vmatpush2.bf16.msra.mxu0 0
    %330 = vmatprep.subr.bf16.mxu0 0
    %331 = vmatpush2.bf16.msra.mxu0 0
    %332 = vmatprep.subr.bf16.mxu0 0
    %333 = vmatpush2.bf16.msra.mxu0 0
    %334 = vmatprep.mubr.bf16.mxu0 0
    %335 = vmatmul.mubr.bf16.gmra.mxu0 %v230
    %v336 = vpop.f32.mrf.mxu0
    %v337 = vadd.f32 %v252, %v336
    %v338 = vpop.f32.mrf.mxu0
    %v339 = vpop.f32.mrf.mxu0
    %v340 = vadd.f32 %v252, %v339
    %v341 = vpop.f32.mrf.mxu0
    %342 = vdwg.mxu0
    %343 = vst [vmem:[#allocation8] sm:$0xff] %v337
    %344 = vst [vmem:[#allocation8 + $0x8] sm:$0xff] %v340
    // Predicated region
    $region34: #{tpu_custom_call.1} parent=1 // pred_check
      _
    $region35: #{tpu_custom_call.1} parent=1 // pred_check_branch
      %346 = sbr.rel (0) target = $region37
    $region36: #{tpu_custom_call.1} parent=1 // pred_region
      %s348 = ssub.s32 256, 256
      %349 = vsyncadd [#allocation4], %s348
      %s350 = sshll.u32 [#allocation8], 4
      %s351 = int_to_ptr.vmem [resolvable:$true] %s350
      %356 = dma.vmem_to_hbm [thread:$0]  %s351, 256, %s5, [#allocation4], 128, 128, 8
    $region37: #{tpu_custom_call.1} parent=1 // pred_fallthru
      _
    // Predicated region
    $region38: #{tpu_custom_call.1} parent=1 // pred_check
      _
    $region39: #{tpu_custom_call.1} parent=1 // pred_check_branch
      %358 = sbr.rel (0) target = $region41
    $region40: #{tpu_custom_call.1} parent=1 // pred_region
      %359 = dma.done [#allocation4], 256
    $region41: #{tpu_custom_call.1} parent=1 // pred_fallthru
      _
    %360 = vsyncpa [#allocation3], 1
    %361 = vsyncpa [#allocation6], 1
    %362 = vsyncpa [#allocation4], 1

</llo_original>
